<compile_context>
chip_gen: v7x
topology: tpu7x:2x2x1
jax: 0.10.0
libtpu: 0.0.40
codegen_flags: <defaults>
</compile_context>

<pallas_src>
import jax
import jax.numpy as jnp
from jax.experimental import pallas as pl
from jax.experimental.pallas import tpu as pltpu


def _copy_kernel(x_ref, o_ref):
    # Identity copy of the current VMEM tile (the reshape "data path").
    o_ref[...] = x_ref[...]


def _resolve_shape(target_shape, total):
    """torch.view-style shape resolution (supports a single -1)."""
    shape = list(target_shape)
    if -1 in shape:
        idx = shape.index(-1)
        known = 1
        for i, s in enumerate(shape):
            if i != idx:
                known *= s
        if known == 0:
            raise ValueError(
                f"cannot infer -1 dimension in {target_shape}: other dims "
                f"multiply to 0")
        if total % known != 0:
            raise ValueError(
                f"view shape {target_shape} incompatible with {total} elements")
        shape[idx] = total // known
    prod = 1
    for s in shape:
        prod *= s
    if prod != total:
        raise ValueError(
            f"view shape {target_shape} incompatible with {total} elements")
    return tuple(shape)


# Native sublane packing per element size (f32/int32: 8, bf16/f16: 16, int8: 32).
_SUBLANE_BY_ITEMSIZE = {4: 8, 2: 16, 1: 32}
# Wider lanes first: fewer, longer, fully contiguous DMA bursts + fewer steps.
_LANE_CANDIDATES = (32768, 16384, 8192, 4096, 2048, 1024, 512, 256, 128)


def _ceil_div(a, b):
    return -(-a // b)


def _chip_info():
    """Return (physical_vmem_bytes, tensorcores_per_chip) for the local TPU."""
    kind = ""
    try:
        kind = jax.devices()[0].device_kind.lower()
    except Exception:
        pass
    if "v7" in kind:
        return 64 * 1024 * 1024, 2          # v7x: 64 MiB VMEM per TC, 2 TCs
    return 128 * 1024 * 1024, 1             # v5e / v6e (and older): 128 MiB, 1 TC


def _pick_tile_rows(rows, lanes, itemsize, sublane, target_block_bytes, num_cores):
    """Choose the row-tile: big blocks, exact divisors (no masked tail),
    and >= 2 (even) grid steps only on multi-TensorCore chips."""
    if rows <= sublane:
        return rows                           # full-array dim -> always legal

    # Largest sublane-multiple row count within the per-block byte budget.
    max_rows = (target_block_bytes // (lanes * itemsize)) // sublane * sublane
    max_rows = max(sublane, min(max_rows, rows))

    if num_cores == 1:
        # Single TensorCore: one full block if it fits (no extra step overhead).
        if rows <= max_rows:
            return rows
    else:
        # v7x: guarantee at least `num_cores` grid steps so both TCs get work.
        per_core = _ceil_div(_ceil_div(rows, num_cores), sublane) * sublane
        max_rows = min(max_rows, max(sublane, per_core))

    # Prefer an exact divisor of rows (every block full-width -> unmasked vst).
    t = (max_rows // sublane) * sublane
    if num_cores > 1:
        # First pass: exact divisor AND an even number of grid steps.
        tt = t
        while tt >= sublane:
            if rows % (num_cores * tt) == 0:
                return tt
            tt -= sublane
    while t >= sublane:
        if rows % t == 0:
            return t
        t -= sublane

    # Fall back to a ragged (masked) tail block.
    return max(sublane, (max_rows // sublane) * sublane)


def _pallas_copy_2d(x2d, sublane):
    """Identity copy of a lane-dense (rows, lanes) slab through VMEM."""
    rows, lanes = x2d.shape
    itemsize = jnp.dtype(x2d.dtype).itemsize

    phys_vmem, num_cores = _chip_info()
    # ~1/8 of physical VMEM per block: 8 MiB on v7x, 16 MiB on v5e/v6e.
    target_block_bytes = phys_vmem // 8

    tile_rows = _pick_tile_rows(
        rows, lanes, itemsize, sublane, target_block_bytes, num_cores)
    grid_n = _ceil_div(rows, tile_rows)

    block_bytes = tile_rows * lanes * itemsize
    # VMEM budget: 4x block (input + output, double-buffered) + headroom,
    # capped well below physical VMEM (leave room for compiler scratch).
    vmem_limit = min(4 * block_bytes + 16 * 1024 * 1024, (phys_vmem * 3) // 4)

    return pl.pallas_call(
        _copy_kernel,
        out_shape=jax.ShapeDtypeStruct((rows, lanes), x2d.dtype),
        grid=(grid_n,),
        in_specs=[pl.BlockSpec((tile_rows, lanes), lambda i: (i, 0))],
        out_specs=pl.BlockSpec((tile_rows, lanes), lambda i: (i, 0)),
        cost_estimate=pl.CostEstimate(
            flops=0,
            transcendentals=0,
            bytes_accessed=2 * rows * lanes * itemsize,
        ),
        compiler_params=pltpu.CompilerParams(
            dimension_semantics=("parallel",),
            vmem_limit_bytes=vmem_limit,
        ),
    )(x2d)


def pallas_reshape(x, target_shape, *, use_kernel=False):
    """Reshape `x` to `target_shape` (torch .view semantics).

    Default (use_kernel=False) is metadata-only: a row-major reshape moves no
    data.  use_kernel=True routes the bytes through a Pallas identity-copy
    kernel (demonstration of the TPU data path; adds one HBM read + write).
    """
    total = x.size
    out_shape = _resolve_shape(target_shape, total)

    # Fast path: pure metadata.  Also used when the element count is not
    # lane-divisible (no padding copies) or empty.
    if not use_kernel or total == 0 or total % 128 != 0:
        return jnp.reshape(x, out_shape)

    itemsize = jnp.dtype(x.dtype).itemsize
    sublane = _SUBLANE_BY_ITEMSIZE.get(itemsize, 8)

    # Widest lane dim (multiple of 128) dividing `total`; prefer one leaving
    # at least `sublane` rows so blocks stay (sublane, 128)-aligned.
    lanes = None
    for cand in _LANE_CANDIDATES:
        if total % cand == 0 and (total // cand) >= sublane:
            lanes = cand
            break
    if lanes is None:
        for cand in _LANE_CANDIDATES:
            if total % cand == 0:
                lanes = cand
                break

    rows = total // lanes
    x2d = jnp.reshape(x, (rows, lanes))   # metadata only
    y2d = _pallas_copy_2d(x2d, sublane)
    return jnp.reshape(y2d, out_shape)    # metadata only


class Reshape:
    """JAX/Pallas equivalent of the PyTorch Reshape module (no parameters).

    Note: torch .view shares storage with the input; JAX is functional so a
    new array (or alias) is returned, but forward values/shape/dtype match.
    Default is the metadata-only path (fastest; zero HBM traffic).
    """

    def __init__(self, shape, use_kernel=False):
        self.shape = shape
        self.use_kernel = use_kernel

    def __call__(self, x):
        return pallas_reshape(x, self.shape, use_kernel=self.use_kernel)


if __name__ == "__main__":
    key = jax.random.PRNGKey(0)
    # Small NCHW-like input, as a GAN discriminator would flatten before a linear.
    x = jax.random.normal(key, (2, 4, 16, 16), dtype=jnp.float32)
    ref = jnp.reshape(x, (2, -1))  # same row-major semantics as torch.view

    # 1) Default (production) path: metadata-only reshape.
    module = Reshape((2, -1))              # flatten all but batch, torch-style -1
    y_meta = jax.block_until_ready(module(x))
    assert y_meta.shape == (2, 4 * 16 * 16)
    assert y_meta.dtype == x.dtype
    assert bool(jnp.array_equal(y_meta, ref))

    # 2) Explicit Pallas data-path (identity copy through VMEM).
    module_k = Reshape((2, -1), use_kernel=True)
    y_kern = jax.block_until_ready(module_k(x))
    assert y_kern.shape == (2, 4 * 16 * 16)
    assert y_kern.dtype == x.dtype
    assert bool(jnp.array_equal(y_kern, ref))

    # 3) Larger kernel-path case (wide-lane selection, multi-row slab).
    x_big = jax.random.normal(key, (2, 8, 64, 64), dtype=jnp.float32)
    y_big = jax.block_until_ready(pallas_reshape(x_big, (2, -1), use_kernel=True))
    assert bool(jnp.array_equal(y_big, jnp.reshape(x_big, (2, -1))))

    # 4) Non-lane-divisible size falls back to the metadata path even with
    #    use_kernel=True (no padding copies).
    x_odd = jax.random.normal(key, (3, 5, 7), dtype=jnp.float32)
    y_odd = jax.block_until_ready(pallas_reshape(x_odd, (-1,), use_kernel=True))
    assert bool(jnp.array_equal(y_odd, jnp.reshape(x_odd, (-1,))))

    print("KERNEL_OK")
</pallas_src>

<mosaic_0001>
module attributes {stable_mosaic.version = 11 : i64} {
  func.func @_copy_kernel(%arg0: i32, %arg1: memref<8x256xf32, #tpu.memory_space<vmem>>, %arg2: memref<8x256xf32, #tpu.memory_space<vmem>>) attributes {dimension_semantics = [#tpu.dimension_semantics<parallel>], iteration_bounds = array<i64: 1>, scalar_prefetch = 0 : i64, scratch_operands = 0 : i64, tpu.core_type = #tpu.core_type<tc>, window_params = [{transform_indices = @transform_0, window_bounds = array<i64: 8, 256>}, {transform_indices = @transform_1, window_bounds = array<i64: 8, 256>}]} {
    %c0 = arith.constant 0 : index
    %c0_0 = arith.constant 0 : index
    %0 = vector.load %arg1[%c0, %c0_0] : memref<8x256xf32, #tpu.memory_space<vmem>>, vector<8x256xf32>
    %c0_1 = arith.constant 0 : index
    %c0_2 = arith.constant 0 : index
    %1 = vector.load %arg2[%c0_1, %c0_2] : memref<8x256xf32, #tpu.memory_space<vmem>>, vector<8x256xf32>
    tpu.vector_store %arg2[%c0_1, %c0_2], %0 {strides = array<i32>} : memref<8x256xf32, #tpu.memory_space<vmem>>, vector<8x256xf32>,
    return
  }
  func.func @transform_0(%arg0: i32) -> (i32, i32) {
    %c0_i32 = arith.constant 0 : i32
    %c0_i32_0 = arith.constant 0 : i32
    return %arg0, %c0_i32 : i32, i32
  }
  func.func @transform_1(%arg0: i32) -> (i32, i32) {
    %c0_i32 = arith.constant 0 : i32
    %c0_i32_0 = arith.constant 0 : i32
    return %arg0, %c0_i32 : i32, i32
  }
}

</mosaic_0001>

<llo_original>
// kernel: tpu_custom_call.1
$region0: #{tpu_custom_call.1}
  #allocation0 [shape = 'u32[]', space=smem, size = 0x4, offset = 0x4, fixed_abs, tag = 'smem constant byte address 0x4 - core index']
  #allocation1 [shape = 'u32[144,128]{1,0:T(1,128)}', space=vmem, size = 0x12000, scoped, tag = 'internal scratch']
  %s0 = inlined_call_operand.hbm [shape: f32[8,256], index: 0, kind: input, shape index: {}]
  %s1 = inlined_call_operand.hbm [shape: f32[8,256], index: 1, kind: output, shape index: {}]
  %s2 = sld [smem:[#allocation0]]
  $region18: #{tpu_custom_call.1} parent=0
    _
  %s4 = ssub.s32 1, %s2
  %s5 = scalar_select 0, %s4, %s2
  $region1: #{tpu_custom_call.1} parent=0
    #allocation2 [shape = 'u8[8192]{0}', space=vmem, size = 0x2000, scoped, tag = 'input window, operand 0, single buffered']
    #allocation3 [shape = 's32[1]{0}', space=sflag, size = 0x4, scoped, tag = 'scoped memory for tpu_custom_call.1']
    #allocation4 [shape = 's32[1]{0}', space=sflag, size = 0x4, scoped, tag = 'scoped memory for tpu_custom_call.1']
    #allocation5 [shape = 'u8[8192]{0}', space=vmem, size = 0x2000, scoped, tag = 'output window, operand 0, single buffered']
    %6 = vsyncpa [#allocation3], 0
    %7 = vsyncpa [#allocation4], 0
    // Predicated region
    $region2: #{tpu_custom_call.1} parent=1 // pred_check
      _
    $region3: #{tpu_custom_call.1} parent=1 // pred_check_branch
      %9 = sbr.rel (0) target = $region5
    $region4: #{tpu_custom_call.1} parent=1 // pred_region
      %s11 = ssub.s32 256, 256
      %12 = vsyncadd [#allocation3], %s11
      %s14 = sshll.u32 [#allocation2], 4
      %s15 = int_to_ptr.vmem [resolvable:$true] %s14
      %17 = dma.hbm_to_vmem [thread:$0]  %s0, 256, %s15, [#allocation3]
    $region5: #{tpu_custom_call.1} parent=1 // pred_fallthru
      _
    // Predicated region
    $region6: #{tpu_custom_call.1} parent=1 // pred_check
      _
    $region7: #{tpu_custom_call.1} parent=1 // pred_check_branch
      %19 = sbr.rel (0) target = $region9
    $region8: #{tpu_custom_call.1} parent=1 // pred_region
      %20 = dma.done [#allocation3], 256
    $region9: #{tpu_custom_call.1} parent=1 // pred_fallthru
      _
    %v21 = vld [vmem:[#allocation2] sm:$0xff]
    %v22 = vld [vmem:[#allocation2 + $0x8] sm:$0xff]
    %23 = vst [vmem:[#allocation5] sm:$0xff] %v21
    %24 = vst [vmem:[#allocation5 + $0x8] sm:$0xff] %v22
    // Predicated region
    $region10: #{tpu_custom_call.1} parent=1 // pred_check
      _
    $region11: #{tpu_custom_call.1} parent=1 // pred_check_branch
      %26 = sbr.rel (0) target = $region13
    $region12: #{tpu_custom_call.1} parent=1 // pred_region
      %s28 = ssub.s32 256, 256
      %29 = vsyncadd [#allocation4], %s28
      %s31 = sshll.u32 [#allocation5], 4
      %s32 = int_to_ptr.vmem [resolvable:$true] %s31
      %34 = dma.vmem_to_hbm [thread:$0]  %s32, 256, %s1, [#allocation4]
    $region13: #{tpu_custom_call.1} parent=1 // pred_fallthru
      _
    // Predicated region
    $region14: #{tpu_custom_call.1} parent=1 // pred_check
      _
    $region15: #{tpu_custom_call.1} parent=1 // pred_check_branch
      %36 = sbr.rel (0) target = $region17
    $region16: #{tpu_custom_call.1} parent=1 // pred_region
      %37 = dma.done [#allocation4], 256
    $region17: #{tpu_custom_call.1} parent=1 // pred_fallthru
      _
    %38 = vsyncpa [#allocation3], 1
    %39 = vsyncpa [#allocation4], 1

</llo_original>
